<compile_context>
chip_gen: v7x
topology: tpu7x:2x2x1
jax: 0.10.0
libtpu: 0.0.40
codegen_flags: <defaults>
</compile_context>

<pallas_src>
import functools

import jax
import jax.numpy as jnp
from jax.experimental import pallas as pl
from jax.experimental.pallas import tpu as pltpu


def _round_up(x, m):
    return ((x + m - 1) // m) * m


def _cdiv(x, m):
    return (x + m - 1) // m


def siamese_fc_kernel(x1_ref, x2_ref, w_ref, b_ref, o_ref):
    # x1_ref/x2_ref: (TB, F) VMEM tiles of the two inputs.
    # w_ref:         (2, F) lane-major weights, resident across grid steps.
    # b_ref:         (1,) scalar bias in SMEM.
    # o_ref:         (TB, 1) output tile (ragged tail rows are masked by Pallas).
    x1 = x1_ref[...]
    x2 = x2_ref[...]
    w1 = w_ref[0:1, :]                      # (1, F), broadcasts over batch rows
    w2 = w_ref[1:2, :]
    # VPU multiply-add, then XLU lane reduction -> (TB, 1).
    acc = x1 * w1 + x2 * w2
    s = jnp.sum(acc, axis=-1, keepdims=True)
    o_ref[...] = (s + b_ref[0]).astype(o_ref.dtype)


@functools.partial(jax.jit, static_argnames=("block_b",))
def siamese_forward(x1, x2, weight, bias, *, block_b=1024):
    """x1, x2: (B, F) float32. weight: (1, 2F). bias: (1,). Returns (B, 1)."""
    B, F = x1.shape

    # Lane-major weight layout: (2, F), one dense row per branch.
    #   cat([x1, x2], 1) @ W.T + b == sum(x1*W[:, :F] + x2*W[:, F:], -1) + b
    w = jnp.concatenate([weight[:, :F], weight[:, F:]], axis=0)     # (2, F)

    # --- Batch tile sizing (all static, derived from shapes) -----------------
    # VMEM budget: 2 inputs x 2 pipeline buffers x TB x F x 4 B <= 24 MiB.
    bytes_per_row = 2 * 2 * F * 4
    budget_rows = max(8, ((24 << 20) // bytes_per_row) // 8 * 8)
    TB = min(block_b, budget_rows)
    # Keep >=2 grid steps whenever B allows, so the "parallel" batch axis
    # actually shards across both v7x TensorCores.
    TB = min(TB, _round_up(_cdiv(B, 2), 8))
    # Never larger than the (8-aligned) batch; always a multiple of 8.
    TB = _round_up(max(8, min(TB, _round_up(B, 8))), 8)

    grid_b = _cdiv(B, TB)   # ragged last tile handled by Pallas masking

    cost = pl.CostEstimate(
        flops=4 * B * F,                                  # 2F mul + 2F add per row
        transcendentals=0,
        bytes_accessed=4 * (2 * B * F + 2 * F + B),
    )

    out = pl.pallas_call(
        siamese_fc_kernel,
        out_shape=jax.ShapeDtypeStruct((B, 1), x1.dtype),
        grid_spec=pltpu.PrefetchScalarGridSpec(
            num_scalar_prefetch=0,
            grid=(grid_b,),
            in_specs=[
                pl.BlockSpec((TB, F), lambda i: (i, 0)),            # x1 tile
                pl.BlockSpec((TB, F), lambda i: (i, 0)),            # x2 tile
                pl.BlockSpec((2, F), lambda i: (0, 0)),             # weights (resident)
                pl.BlockSpec(memory_space=pltpu.MemorySpace.SMEM),  # bias scalar
            ],
            out_specs=pl.BlockSpec((TB, 1), lambda i: (i, 0)),
        ),
        compiler_params=pltpu.CompilerParams(
            dimension_semantics=("parallel",),
            vmem_limit_bytes=32 * 1024 * 1024,
        ),
        cost_estimate=cost,
    )(x1, x2, w, bias)
    return out


if __name__ == "__main__":
    B = 10        # small; non-multiple of 8 -> exercises the ragged last tile
    F = 512       # num_ftrs_resnet for resnet18 (fc.in_features)
    key = jax.random.PRNGKey(0)
    k1, k2, kw, kb = jax.random.split(key, 4)

    x1 = jax.random.normal(k1, (B, F), dtype=jnp.float32)
    x2 = jax.random.normal(k2, (B, F), dtype=jnp.float32)

    # Deterministic PyTorch-style Linear init: U(-1/sqrt(in), 1/sqrt(in)), in = 2F.
    bound = 1.0 / jnp.sqrt(jnp.float32(2 * F))
    weight = jax.random.uniform(kw, (1, 2 * F), dtype=jnp.float32,
                                minval=-bound, maxval=bound)
    bias = jax.random.uniform(kb, (1,), dtype=jnp.float32,
                              minval=-bound, maxval=bound)

    out = siamese_forward(x1, x2, weight, bias)
    out = jax.block_until_ready(out)

    # Reference check (plain JAX, mirrors the PyTorch forward exactly).
    ref = jnp.concatenate([x1, x2], axis=1) @ weight.T + bias
    assert out.shape == (B, 1)
    assert jnp.allclose(out, ref, atol=1e-4, rtol=1e-4)

    print("KERNEL_OK")
</pallas_src>

<mosaic_0001>
module attributes {stable_mosaic.version = 11 : i64} {
  func.func @siamese_fc_kernel(%arg0: i32, %arg1: memref<8x512xf32, #tpu.memory_space<vmem>>, %arg2: memref<8x512xf32, #tpu.memory_space<vmem>>, %arg3: memref<2x512xf32, #tpu.memory_space<vmem>>, %arg4: memref<1xf32, #tpu.memory_space<smem>>, %arg5: memref<8x1xf32, #tpu.memory_space<vmem>>) attributes {dimension_semantics = [#tpu.dimension_semantics<parallel>], iteration_bounds = array<i64: 2>, scalar_prefetch = 0 : i64, scratch_operands = 0 : i64, tpu.core_type = #tpu.core_type<tc>, window_params = [{transform_indices = @transform_0, window_bounds = array<i64: 8, 512>}, {transform_indices = @transform_1, window_bounds = array<i64: 8, 512>}, {pipeline_mode = #tpu.pipeline_mode<synchronous>, transform_indices = @transform_2, window_bounds = array<i64: 2, 512>}, {transform_indices = @transform_3, window_bounds = array<i64: 1>}, {transform_indices = @transform_4, window_bounds = array<i64: 8, 1>}]} {
    %c0 = arith.constant 0 : index
    %c0_0 = arith.constant 0 : index
    %0 = vector.load %arg1[%c0, %c0_0] : memref<8x512xf32, #tpu.memory_space<vmem>>, vector<8x512xf32>
    %c0_1 = arith.constant 0 : index
    %c0_2 = arith.constant 0 : index
    %1 = vector.load %arg2[%c0_1, %c0_2] : memref<8x512xf32, #tpu.memory_space<vmem>>, vector<8x512xf32>
    %c0_3 = arith.constant 0 : index
    %c0_4 = arith.constant 0 : index
    %2 = vector.load %arg3[%c0_3, %c0_4] : memref<2x512xf32, #tpu.memory_space<vmem>>, vector<1x512xf32>
    %c1 = arith.constant 1 : index
    %c0_5 = arith.constant 0 : index
    %3 = vector.load %arg3[%c1, %c0_5] : memref<2x512xf32, #tpu.memory_space<vmem>>, vector<1x512xf32>
    %4 = vector.broadcast %2 : vector<1x512xf32> to vector<8x512xf32>
    %5 = arith.mulf %0, %4 : vector<8x512xf32>
    %6 = vector.broadcast %3 : vector<1x512xf32> to vector<8x512xf32>
    %7 = arith.mulf %1, %6 : vector<8x512xf32>
    %8 = arith.addf %5, %7 : vector<8x512xf32>
    %cst = arith.constant dense<0.000000e+00> : vector<8xf32>
    %9 = vector.multi_reduction <add>, %8, %cst [1] : vector<8x512xf32> to vector<8xf32>
    %10 = vector.shape_cast %9 : vector<8xf32> to vector<8x1xf32>
    %c0_6 = arith.constant 0 : index
    %11 = memref.load %arg4[%c0_6] : memref<1xf32, #tpu.memory_space<smem>>
    %12 = vector.broadcast %11 : f32 to vector<8x1xf32>
    %13 = arith.addf %10, %12 : vector<8x1xf32>
    %c0_7 = arith.constant 0 : index
    %c0_8 = arith.constant 0 : index
    %14 = vector.load %arg5[%c0_7, %c0_8] : memref<8x1xf32, #tpu.memory_space<vmem>>, vector<8x1xf32>
    tpu.vector_store %arg5[%c0_7, %c0_8], %13 {strides = array<i32>} : memref<8x1xf32, #tpu.memory_space<vmem>>, vector<8x1xf32>,
    return
  }
  func.func @transform_0(%arg0: i32) -> (i32, i32) {
    %c0_i32 = arith.constant 0 : i32
    %c0_i32_0 = arith.constant 0 : i32
    return %arg0, %c0_i32 : i32, i32
  }
  func.func @transform_1(%arg0: i32) -> (i32, i32) {
    %c0_i32 = arith.constant 0 : i32
    %c0_i32_0 = arith.constant 0 : i32
    return %arg0, %c0_i32 : i32, i32
  }
  func.func @transform_2(%arg0: i32) -> (i32, i32) {
    %c0_i32 = arith.constant 0 : i32
    %c0_i32_0 = arith.constant 0 : i32
    %c0_i32_1 = arith.constant 0 : i32
    return %c0_i32, %c0_i32_0 : i32, i32
  }
  func.func @transform_3(%arg0: i32) -> i32 {
    %c0_i32 = arith.constant 0 : i32
    %c0_i32_0 = arith.constant 0 : i32
    return %c0_i32 : i32
  }
  func.func @transform_4(%arg0: i32) -> (i32, i32) {
    %c0_i32 = arith.constant 0 : i32
    %c0_i32_0 = arith.constant 0 : i32
    return %arg0, %c0_i32 : i32, i32
  }
}

</mosaic_0001>

<llo_original>
// kernel: siamese_forward.1
$region0: #{siamese_forward.1}
  #allocation0 [shape = 'u32[]', space=smem, size = 0x4, offset = 0x4, fixed_abs, tag = 'smem constant byte address 0x4 - core index']
  #allocation1 [shape = 'u32[144,128]{1,0:T(1,128)}', space=vmem, size = 0x12000, scoped, tag = 'internal scratch']
  #allocation2 [shape = 'f32[1]{0:T(128)S(6)}', space=smem, size = 0x200, scoped, tag = 'scoped memory for siamese_forward.1']
  %s0 = inlined_call_operand.hbm [shape: f32[10,512], index: 0, kind: input, shape index: {}]
  %s1 = inlined_call_operand.hbm [shape: f32[10,512], index: 1, kind: input, shape index: {}]
  %s2 = inlined_call_operand.vmem [shape: f32[2,512], index: 2, kind: input, shape index: {}]
  %s3 = inlined_call_operand.<no memory space> [shape: f32[1], index: 3, kind: input, shape index: {}]
  %s4 = inlined_call_operand.vmem [shape: f32[10,1], index: 4, kind: output, shape index: {}]
  %s5 = sld [smem:[#allocation0]]
  $region57: #{siamese_forward.1} parent=0
    _
  %s7 = ssub.s32 1, %s5
  %s8 = scalar_select 0, %s7, %s5
  %9 = sst [smem:[#allocation2]] %s3
  $region1: #{siamese_forward.1} parent=0
    #allocation3 [shape = 'u8[32768]{0}', space=vmem, size = 0x8000, scoped, tag = 'input window, operand 0']
    #allocation4 [shape = 's32[2]{0}', space=sflag, size = 0x8, scoped, tag = 'scoped memory for siamese_forward.1']
    #allocation5 [shape = 'u8[32768]{0}', space=vmem, size = 0x8000, scoped, tag = 'input window, operand 1']
    #allocation6 [shape = 's32[2]{0}', space=sflag, size = 0x8, scoped, tag = 'scoped memory for siamese_forward.1']
    %10 = vsyncpa [#allocation4], 0
    %s11 = scalar_lea.sflag [#allocation4], 1
    %12 = vsyncpa %s11, 0
    %13 = vsyncpa [#allocation6], 0
    %s14 = scalar_lea.sflag [#allocation6], 1
    %15 = vsyncpa %s14, 0
    loop: start=0, step=1, limit=4
    $region2: #{siamese_forward.1} parent=1 // loop_pre_header
      _
    $region3: #{siamese_forward.1} parent=1 // loop_header
      %s17 = sphi 0, %s21
      %p18 = scmp.ge.s32.totalorder %s17, 4
      %s27 = sphi 0, %s29
      %s30 = sphi 0, %s27
      %s31 = sphi 0, %s30
      %s47 = sphi 0, %s31
      %s53 = sphi 0, %s55
      %s56 = sphi 0, %s53
      %s57 = sphi 0, %s56
      %s73 = sphi 0, %s57
      %s77 = sphi 0, %s77
      %s79 = sphi 0, %s77
      %s80 = sphi 0, %s79
      %s94 = sphi 0, %s80
      %s98 = sphi 0, %s98
      %s100 = sphi 0, %s98
      %s101 = sphi 0, %s100
      %s115 = sphi 0, %s101
      %s121 = sphi 0, %s123
      %s124 = sphi 0, %s121
      %s125 = sphi 0, %s124
      %s141 = sphi 0, %s125
    $region4: #{siamese_forward.1} parent=1 // loop_header_branch
      %20 = sbr.rel (%p18) target = $region8
    $region5: #{siamese_forward.1} parent=1 // loop_body
      %s22 = ssub.s32 %s17, 1
      %s23 = ssub.s32 %s17, 2
      %s24 = sadd.s32 %s17, 1
      %s25 = ssub.s32 %s17, %s24
      %p26 = scmp.eq.s32.totalorder %s25, 0
      %s28 = sadd.s32 %s27, 1
      %s29 = scalar_select %p26, %s27, %s28
      %p32 = pneg %p26
      %p33 = scmp.eq.s32.totalorder %s17, 1
      %p34 = por %p32, %p33
      %p35 = scmp.ne.s32.totalorder %s27, %s30
      %p36 = scmp.eq.s32.totalorder %s17, 0
      %p37 = por %p35, %p36
      %p38 = scmp.ne.s32.totalorder %s27, %s30
      %p39 = scmp.eq.s32.totalorder %s22, 1
      %p40 = por %p38, %p39
      %p41 = scmp.ne.s32.totalorder %s30, %s31
      %p42 = scmp.eq.s32.totalorder %s22, 0
      %p43 = por %p41, %p42
      %p44 = scmp.ne.s32.totalorder %s30, %s31
      %p45 = scmp.eq.s32.totalorder %s23, 1
      %p46 = por %p44, %p45
      %p48 = scmp.ne.s32.totalorder %s31, %s47
      %p49 = scmp.eq.s32.totalorder %s23, 0
      %p50 = por %p48, %p49
      %s51 = ssub.s32 %s17, %s24
      %p52 = scmp.eq.s32.totalorder %s51, 0
      %s54 = sadd.s32 %s53, 1
      %s55 = scalar_select %p52, %s53, %s54
      %p58 = pneg %p52
      %p59 = scmp.eq.s32.totalorder %s17, 1
      %p60 = por %p58, %p59
      %p61 = scmp.ne.s32.totalorder %s53, %s56
      %p62 = scmp.eq.s32.totalorder %s17, 0
      %p63 = por %p61, %p62
      %p64 = scmp.ne.s32.totalorder %s53, %s56
      %p65 = scmp.eq.s32.totalorder %s22, 1
      %p66 = por %p64, %p65
      %p67 = scmp.ne.s32.totalorder %s56, %s57
      %p68 = scmp.eq.s32.totalorder %s22, 0
      %p69 = por %p67, %p68
      %p70 = scmp.ne.s32.totalorder %s56, %s57
      %p71 = scmp.eq.s32.totalorder %s23, 1
      %p72 = por %p70, %p71
      %p74 = scmp.ne.s32.totalorder %s57, %s73
      %p75 = scmp.eq.s32.totalorder %s23, 0
      %p76 = por %p74, %p75
      %s78 = sadd.s32 %s77, 1
      %p81 = scmp.eq.s32.totalorder %s17, 1
      %p82 = scmp.ne.s32.totalorder %s77, %s79
      %p83 = scmp.eq.s32.totalorder %s17, 0
      %p84 = por %p82, %p83
      %p85 = scmp.ne.s32.totalorder %s77, %s79
      %p86 = scmp.eq.s32.totalorder %s22, 1
      %p87 = por %p85, %p86
      %p88 = scmp.ne.s32.totalorder %s79, %s80
      %p89 = scmp.eq.s32.totalorder %s22, 0
      %p90 = por %p88, %p89
      %p91 = scmp.ne.s32.totalorder %s79, %s80
      %p92 = scmp.eq.s32.totalorder %s23, 1
      %p93 = por %p91, %p92
      %p95 = scmp.ne.s32.totalorder %s80, %s94
      %p96 = scmp.eq.s32.totalorder %s23, 0
      %p97 = por %p95, %p96
      %s99 = sadd.s32 %s98, 1
      %p102 = scmp.eq.s32.totalorder %s17, 1
      %p103 = scmp.ne.s32.totalorder %s98, %s100
      %p104 = scmp.eq.s32.totalorder %s17, 0
      %p105 = por %p103, %p104
      %p106 = scmp.ne.s32.totalorder %s98, %s100
      %p107 = scmp.eq.s32.totalorder %s22, 1
      %p108 = por %p106, %p107
      %p109 = scmp.ne.s32.totalorder %s100, %s101
      %p110 = scmp.eq.s32.totalorder %s22, 0
      %p111 = por %p109, %p110
      %p112 = scmp.ne.s32.totalorder %s100, %s101
      %p113 = scmp.eq.s32.totalorder %s23, 1
      %p114 = por %p112, %p113
      %p116 = scmp.ne.s32.totalorder %s101, %s115
      %p117 = scmp.eq.s32.totalorder %s23, 0
      %p118 = por %p116, %p117
      %s119 = ssub.s32 %s17, %s24
      %p120 = scmp.eq.s32.totalorder %s119, 0
      %s122 = sadd.s32 %s121, 1
      %s123 = scalar_select %p120, %s121, %s122
      %p126 = pneg %p120
      %p127 = scmp.eq.s32.totalorder %s17, 1
      %p128 = por %p126, %p127
      %p129 = scmp.ne.s32.totalorder %s121, %s124
      %p130 = scmp.eq.s32.totalorder %s17, 0
      %p131 = por %p129, %p130
      %p132 = scmp.ne.s32.totalorder %s121, %s124
      %p133 = scmp.eq.s32.totalorder %s22, 1
      %p134 = por %p132, %p133
      %p135 = scmp.ne.s32.totalorder %s124, %s125
      %p136 = scmp.eq.s32.totalorder %s22, 0
      %p137 = por %p135, %p136
      %p138 = scmp.ne.s32.totalorder %s124, %s125
      %p139 = scmp.eq.s32.totalorder %s23, 1
      %p140 = por %p138, %p139
      %p142 = scmp.ne.s32.totalorder %s125, %s141
      %p143 = scmp.eq.s32.totalorder %s23, 0
      %p144 = por %p142, %p143
      %p145 = scmp.le.s32.totalorder 1, %s17
      %p146 = scmp.lt.s32.totalorder %s17, 3
      %p147 = pnand %p145, %p146
      %p148 = pneg %p147
      // Predicated region
      $region9: #{siamese_forward.1} parent=5 // pred_check
        _
      $region10: #{siamese_forward.1} parent=5 // pred_check_branch
        %150 = sbr.rel (%p147) target = $region12
      $region11: #{siamese_forward.1} parent=5 // pred_region
        %s151 = ssub.s32 %s17, 1
        // Predicated region
        $region13: #{siamese_forward.1} parent=11 // pred_check
          %p152 = pneg %p90
        $region14: #{siamese_forward.1} parent=11 // pred_check_branch
          %154 = sbr.rel (%p152) target = $region16
        $region15: #{siamese_forward.1} parent=11 // pred_region
          _
        $region16: #{siamese_forward.1} parent=11 // pred_fallthru
          _
        // Predicated region
        $region17: #{siamese_forward.1} parent=11 // pred_check
          %p155 = pneg %p111
        $region18: #{siamese_forward.1} parent=11 // pred_check_branch
          %157 = sbr.rel (%p155) target = $region20
        $region19: #{siamese_forward.1} parent=11 // pred_region
          _
        $region20: #{siamese_forward.1} parent=11 // pred_fallthru
          _
      $region12: #{siamese_forward.1} parent=5 // pred_fallthru
        _
      %p158 = scmp.lt.s32.totalorder %s17, 2
      // Predicated region
      $region21: #{siamese_forward.1} parent=5 // pred_check
        %p159 = pneg %p158
      $region22: #{siamese_forward.1} parent=5 // pred_check_branch
        %161 = sbr.rel (%p159) target = $region24
      $region23: #{siamese_forward.1} parent=5 // pred_region
        // Predicated region
        $region25: #{siamese_forward.1} parent=23 // pred_check
          %p162 = pneg %p37
        $region26: #{siamese_forward.1} parent=23 // pred_check_branch
          %164 = sbr.rel (%p162) target = $region28
        $region27: #{siamese_forward.1} parent=23 // pred_region
          %s165 = sand.u32 %s27, 1
          %s166 = scalar_lea.sflag [#allocation4], %s165
          %s167 = sand.u32 %s27, 1
          %s168 = smul.addr %s167, 32
          %s169 = scalar_lea.vmem [#allocation3], %s168
          %s171 = ssub.s32 512, 512
          %172 = vsyncadd %s166, %s171
          %s173 = smul.addr %s17, 4
          %s174 = smul.addr %s173, 128
          %s175 = scalar_lea.hbm %s0, %s174
          %s177 = sshll.u32 %s169, 4
          %s178 = int_to_ptr.vmem [resolvable:$true] %s177
          %180 = dma.hbm_to_vmem [thread:$0]  %s175, 512, %s178, %s166
        $region28: #{siamese_forward.1} parent=23 // pred_fallthru
          _
        // Predicated region
        $region29: #{siamese_forward.1} parent=23 // pred_check
          %p181 = pneg %p63
        $region30: #{siamese_forward.1} parent=23 // pred_check_branch
          %183 = sbr.rel (%p181) target = $region32
        $region31: #{siamese_forward.1} parent=23 // pred_region
          %s184 = sand.u32 %s53, 1
          %s185 = scalar_lea.sflag [#allocation6], %s184
          %s186 = sand.u32 %s53, 1
          %s187 = smul.addr %s186, 32
          %s188 = scalar_lea.vmem [#allocation5], %s187
          %s190 = ssub.s32 512, 512
          %191 = vsyncadd %s185, %s190
          %s192 = smul.addr %s17, 4
          %s193 = smul.addr %s192, 128
          %s194 = scalar_lea.hbm %s1, %s193
          %s196 = sshll.u32 %s188, 4
          %s197 = int_to_ptr.vmem [resolvable:$true] %s196
          %199 = dma.hbm_to_vmem [thread:$0]  %s194, 512, %s197, %s185
        $region32: #{siamese_forward.1} parent=23 // pred_fallthru
          _
      $region24: #{siamese_forward.1} parent=5 // pred_fallthru
        _
      %p200 = scmp.le.s32.totalorder 1, %s17
      %p201 = scmp.lt.s32.totalorder %s17, 3
      %p202 = pnand %p200, %p201
      %p203 = pneg %p202
      // Predicated region
      $region33: #{siamese_forward.1} parent=5 // pred_check
        _
      $region34: #{siamese_forward.1} parent=5 // pred_check_branch
        %205 = sbr.rel (%p202) target = $region36
      $region35: #{siamese_forward.1} parent=5 // pred_region
        %s206 = ssub.s32 %s17, 1
        %s207 = sand.u32 %s30, 1
        %s208 = scalar_lea.sflag [#allocation4], %s207
        %s209 = sand.u32 %s30, 1
        %s210 = smul.addr %s209, 32
        %s211 = scalar_lea.vmem [#allocation3], %s210
        // Predicated region
        $region37: #{siamese_forward.1} parent=35 // pred_check
          %p212 = pneg %p43
        $region38: #{siamese_forward.1} parent=35 // pred_check_branch
          %214 = sbr.rel (%p212) target = $region40
        $region39: #{siamese_forward.1} parent=35 // pred_region
          %215 = dma.done %s208, 512
        $region40: #{siamese_forward.1} parent=35 // pred_fallthru
          _
        %s216 = sand.u32 %s56, 1
        %s217 = scalar_lea.sflag [#allocation6], %s216
        %s218 = sand.u32 %s56, 1
        %s219 = smul.addr %s218, 32
        %s220 = scalar_lea.vmem [#allocation5], %s219
        // Predicated region
        $region41: #{siamese_forward.1} parent=35 // pred_check
          %p221 = pneg %p69
        $region42: #{siamese_forward.1} parent=35 // pred_check_branch
          %223 = sbr.rel (%p221) target = $region44
        $region43: #{siamese_forward.1} parent=35 // pred_region
          %224 = dma.done %s217, 512
        $region44: #{siamese_forward.1} parent=35 // pred_fallthru
          _
        %s225 = sand.u32 %s30, 1
        %s226 = scalar_lea.sflag [#allocation4], %s225
        %s227 = sand.u32 %s30, 1
        %s228 = smul.addr %s227, 32
        %s229 = scalar_lea.vmem [#allocation3], %s228
        %p230 = pneg %p43
        %p231 = pneg %p40
        %s232 = sand.u32 %s56, 1
        %s233 = scalar_lea.sflag [#allocation6], %s232
        %s234 = sand.u32 %s56, 1
        %s235 = smul.addr %s234, 32
        %s236 = scalar_lea.vmem [#allocation5], %s235
        %p237 = pneg %p69
        %p238 = pneg %p66
        %p239 = pneg %p90
        %p240 = pneg %p87
        %p241 = pneg %p111
        %p242 = pneg %p108
        %p243 = pneg %p137
        %p244 = pneg %p134
        %p245 = scmp.lt.s32.totalorder %s22, 1
        %s246 = scalar_select %p245, %s22, 1
        %s247 = smul.addr %s246, 8
        %s248 = scalar_lea.vmem %s4, %s247
        %p249 = scmp.lt.s32.totalorder %s22, 1
        %s250 = scalar_select %p249, %s22, 1
        %s251 = smul.addr %s250, 8
        %s252 = scalar_lea.vmem %s4, %s251
        %v253 = vld [vmem:[%s211] sm:$0xff]
        %v254 = vld [vmem:[%s211 + $0x8] sm:$0xff]
        %v255 = vld [vmem:[%s211 + $0x10] sm:$0xff]
        %v256 = vld [vmem:[%s211 + $0x18] sm:$0xff]
        %v257 = vld [vmem:[%s220] sm:$0xff]
        %v258 = vld [vmem:[%s220 + $0x8] sm:$0xff]
        %v259 = vld [vmem:[%s220 + $0x10] sm:$0xff]
        %v260 = vld [vmem:[%s220 + $0x18] sm:$0xff]
        %v261 = vld [vmem:[%s2] ss:$2 sm:$0xf]
        %s262 = scalar_lea.vmem %s2, 1
        %v263 = vld [vmem:[%s262] ss:$2 sm:$0xf]
        %v265 = vlaneseq
        %v266 = vshrl.u32 %v265, 7
        %v267 = vsub.s32 0, %v266
        %v268 = vrot.slane %v261, %v267
        %v269 = vlaneseq
        %v270 = vshrl.u32 %v269, 7
        %v271 = vsub.s32 1, %v270
        %v272 = vrot.slane %v261, %v271
        %v273 = vlaneseq
        %v274 = vshrl.u32 %v273, 7
        %v275 = vsub.s32 2, %v274
        %v276 = vrot.slane %v261, %v275
        %v277 = vlaneseq
        %v278 = vshrl.u32 %v277, 7
        %v279 = vsub.s32 3, %v278
        %v280 = vrot.slane %v261, %v279
        %v285 = vmul.f32 %v253, %v268
        %v286 = vmul.f32 %v254, %v272
        %v287 = vmul.f32 %v255, %v276
        %v288 = vmul.f32 %v256, %v280
        %v290 = vlaneseq
        %v291 = vshrl.u32 %v290, 7
        %v292 = vsub.s32 0, %v291
        %v293 = vrot.slane %v263, %v292
        %v294 = vlaneseq
        %v295 = vshrl.u32 %v294, 7
        %v296 = vsub.s32 1, %v295
        %v297 = vrot.slane %v263, %v296
        %v298 = vlaneseq
        %v299 = vshrl.u32 %v298, 7
        %v300 = vsub.s32 2, %v299
        %v301 = vrot.slane %v263, %v300
        %v302 = vlaneseq
        %v303 = vshrl.u32 %v302, 7
        %v304 = vsub.s32 3, %v303
        %v305 = vrot.slane %v263, %v304
        %v310 = vmul.f32 %v257, %v293
        %v311 = vmul.f32 %v258, %v297
        %v312 = vmul.f32 %v259, %v301
        %v313 = vmul.f32 %v260, %v305
        %v314 = vadd.f32 %v285, %v310
        %v315 = vadd.f32 %v286, %v311
        %v316 = vadd.f32 %v287, %v312
        %v317 = vadd.f32 %v288, %v313
        %v318 = vadd.f32 %v314, %v315
        %v319 = vadd.f32 %v318, %v316
        %v320 = vadd.f32 %v319, %v317
        %321 = vadd.xlane.f32.xlu0 %v320
        %v322 = vpop.xlane.xlu0 %321
        %s323 = sld [smem:[#allocation2]]
        %v324 = vstv %s323
        %v325 = vadd.f32 %v322, %v324
        %vm326 = vcmask 7168
        %327 = vst.msk [vmem:[%s252] sm:$0xff] %vm326, %v325
        %p328 = scmp.lt.s32.totalorder %s22, 1
        %s329 = scalar_select %p328, %s22, 1
        %s330 = smul.addr %s329, 8
        %s331 = scalar_lea.vmem %s4, %s330
        // Predicated region
        $region45: #{siamese_forward.1} parent=35 // pred_check
          %p332 = pneg %p134
        $region46: #{siamese_forward.1} parent=35 // pred_check_branch
          %334 = sbr.rel (%p332) target = $region48
        $region47: #{siamese_forward.1} parent=35 // pred_region
          _
        $region48: #{siamese_forward.1} parent=35 // pred_fallthru
          _
      $region36: #{siamese_forward.1} parent=5 // pred_fallthru
        _
      %p335 = scmp.le.s32.totalorder 2, %s17
      // Predicated region
      $region49: #{siamese_forward.1} parent=5 // pred_check
        %p336 = pneg %p335
      $region50: #{siamese_forward.1} parent=5 // pred_check_branch
        %338 = sbr.rel (%p336) target = $region52
      $region51: #{siamese_forward.1} parent=5 // pred_region
        %s339 = ssub.s32 %s17, 2
        // Predicated region
        $region53: #{siamese_forward.1} parent=51 // pred_check
          %p340 = pneg %p140
        $region54: #{siamese_forward.1} parent=51 // pred_check_branch
          %342 = sbr.rel (%p340) target = $region56
        $region55: #{siamese_forward.1} parent=51 // pred_region
          %p343 = scmp.lt.s32.totalorder %s23, 1
          %s344 = scalar_select %p343, %s23, 1
          %s345 = smul.addr %s344, 8
          %s346 = scalar_lea.vmem %s4, %s345
        $region56: #{siamese_forward.1} parent=51 // pred_fallthru
          _
      $region52: #{siamese_forward.1} parent=5 // pred_fallthru
        _
    $region6: #{siamese_forward.1} parent=1 // loop_footer
      %s21 = sadd.s32 1, %s17
    $region7: #{siamese_forward.1} parent=1 // loop_footer_branch
      %16 = sbr.rel target = $region3
    $region8: #{siamese_forward.1} parent=1 // loop_exit
      _
    %347 = vsyncpa [#allocation4], 1
    %s348 = scalar_lea.sflag [#allocation4], 1
    %349 = vsyncpa %s348, 1
    %350 = vsyncpa [#allocation6], 1
    %s351 = scalar_lea.sflag [#allocation6], 1
    %352 = vsyncpa %s351, 1

</llo_original>
